<compile_context>
chip_gen: v6e
topology: v6e:2x2x1
jax: 0.10.0
libtpu: 0.0.40
codegen_flags: <defaults>
</compile_context>

<pallas_src>
import functools

import jax
import jax.numpy as jnp
from jax import lax
from jax.experimental import pallas as pl
from jax.experimental.pallas import tpu as pltpu


def _round_up(x, m):
    return -(-x // m) * m


def _mlp_kernel(num_hidden, u_idx_ref, i_idx_ref, ut_ref, it_ref, *refs):
    """Transposed-activation fused MLP (fc[0] pre-folded into the tables).

    refs = (b0_col, [W_t, b_col] * (num_hidden - 1), wo_col, bout, out_ref).
    Activations inside have shape (features, TB); output block is (1, TB).
    """
    out_ref = refs[-1]
    params = refs[:-1]

    u_idx = u_idx_ref[...]                      # (1, TB) int32
    i_idx = i_idx_ref[...]                      # (1, TB) int32
    tb = u_idx.shape[1]
    n_users = ut_ref.shape[1]
    n_items = it_ref.shape[1]

    # --- embedding gather + fc[0] in one shot -------------------------------
    # ut_ref/it_ref are the fc[0]-premultiplied tables (H0, N); the one-hot
    # matmul on the otherwise-idle MXU therefore yields the first-layer
    # pre-activation directly.  (Out-of-range indices give an all-zero one-hot
    # column, i.e. a zero contribution, unlike jnp.take's clamping.)
    u_onehot = (lax.broadcasted_iota(jnp.int32, (n_users, tb), 0)
                == u_idx).astype(ut_ref.dtype)                      # (Nu, TB)
    i_onehot = (lax.broadcasted_iota(jnp.int32, (n_items, tb), 0)
                == i_idx).astype(it_ref.dtype)                      # (Ni, TB)

    b0 = params[0][...]                         # (H0, 1) f32
    vec = (jnp.dot(ut_ref[...], u_onehot, preferred_element_type=jnp.float32)
           + jnp.dot(it_ref[...], i_onehot, preferred_element_type=jnp.float32)
           + b0)
    vec = jnp.maximum(vec, 0.0)                 # (H0, TB) f32

    # --- remaining fc layers: Linear + ReLU (transposed) ---------------------
    p = 1
    for _ in range(num_hidden - 1):
        w_t = params[p][...]                    # (Hl, Hl-1) bf16
        b = params[p + 1][...]                  # (Hl, 1) f32
        vec = jnp.dot(w_t, vec.astype(w_t.dtype),
                      preferred_element_type=jnp.float32) + b
        vec = jnp.maximum(vec, 0.0)
        p += 2

    # --- affine_output + sigmoid ---------------------------------------------
    # 1-wide output: VPU multiply + sublane (XLU) reduce instead of an M=1 MXU
    # pass; result is a lane-dense (1, TB) row store.
    wo = params[p][...]                         # (Hlast, 1) f32
    bo = params[p + 1][...]                     # (1, 1) f32
    logits = jnp.sum(wo * vec, axis=0, keepdims=True) + bo          # (1, TB)
    out_ref[...] = jax.nn.sigmoid(logits).astype(out_ref.dtype)


def _resident_spec(shape):
    """Full-array block, constant index map, single-buffered (never changes)."""
    nd = len(shape)
    return pl.BlockSpec(shape, lambda i, _nd=nd: (0,) * _nd,
                        pipeline_mode=pl.Buffered(1))


def mlp_forward(user_indices, item_indices, params, *, tb_target=1024):
    """Batch-tiled fused Pallas MLP forward (gather + MLP + sigmoid).

    tb_target should be a multiple of 256 (whole MXU N passes on v6e/v7x).
    """
    latent_dim = params["embedding_user"].shape[1]
    batch = int(user_indices.shape[0])

    # --- batch tiling: large lane-dense tiles, even tile count for v7x -------
    padded_lane = _round_up(batch, 128)
    if padded_lane >= 2 * tb_target:
        tb = tb_target
    elif padded_lane >= 512:
        tb = _round_up(padded_lane // 2, 256)   # 2 tiles, tb multiple of 256
    else:
        tb = min(padded_lane, 256)              # small batch: 1-2 small tiles
    padded = _round_up(padded_lane, tb)
    num_tiles = padded // tb
    if num_tiles > 1 and num_tiles % 2:         # v7x megacore: even split
        padded += tb
        num_tiles += 1

    u_idx = jnp.pad(user_indices.astype(jnp.int32),
                    (0, padded - batch)).reshape(1, padded)
    i_idx = jnp.pad(item_indices.astype(jnp.int32),
                    (0, padded - batch)).reshape(1, padded)

    fc = params["fc"]                   # list of (W (in,out), b (1,out))
    num_hidden = len(fc)
    w0, b0 = fc[0]                      # (2D, H0), (1, H0)
    w0u, w0i = w0[:latent_dim], w0[latent_dim:]

    # Fold fc[0] into the embedding tables (pre-multiply in f32, bf16 on the
    # data path; matmul accumulation stays f32 inside the kernel).
    ut_pre = (params["embedding_user"] @ w0u).T.astype(jnp.bfloat16)  # (H0, Nu)
    it_pre = (params["embedding_item"] @ w0i).T.astype(jnp.bfloat16)  # (H0, Ni)

    kernel_inputs = [u_idx, i_idx, ut_pre, it_pre, b0.T.astype(jnp.float32)]
    for w, b in fc[1:]:
        kernel_inputs += [w.T.astype(jnp.bfloat16), b.T.astype(jnp.float32)]
    kernel_inputs += [params["out_w"].astype(jnp.float32),   # (Hlast, 1)
                      params["out_b"].astype(jnp.float32)]   # (1, 1)

    idx_spec = pl.BlockSpec((1, tb), lambda i: (0, i))
    in_specs = [idx_spec, idx_spec] + [_resident_spec(x.shape)
                                       for x in kernel_inputs[2:]]

    out = pl.pallas_call(
        functools.partial(_mlp_kernel, num_hidden),
        out_shape=jax.ShapeDtypeStruct((1, padded), jnp.float32),
        grid=(num_tiles,),
        in_specs=in_specs,
        out_specs=pl.BlockSpec((1, tb), lambda i: (0, i)),
        compiler_params=pltpu.CompilerParams(
            dimension_semantics=("parallel",),
            # Generous but < v7x's 64 MiB/TC physical; avoids v5e's 16 MiB
            # scoped default capping larger tiles / tables.
            vmem_limit_bytes=48 * 1024 * 1024),
    )(*kernel_inputs)

    return out[0, :batch].reshape(batch, 1)


def init_params(key, n_users, n_items, latent_dim, layers):
    keys = jax.random.split(key, 2 + 2 * len(layers))
    params = {
        "embedding_user": 0.1 * jax.random.normal(
            keys[0], (n_users, latent_dim), jnp.float32),
        "embedding_item": 0.1 * jax.random.normal(
            keys[1], (n_items, latent_dim), jnp.float32),
        "fc": [],
    }
    k = 2
    for in_size, out_size in zip(layers[:-1], layers[1:]):
        w = 0.1 * jax.random.normal(keys[k], (in_size, out_size), jnp.float32)
        b = 0.1 * jax.random.normal(keys[k + 1], (1, out_size), jnp.float32)
        params["fc"].append((w, b))
        k += 2
    params["out_w"] = 0.1 * jax.random.normal(
        keys[k], (layers[-1], 1), jnp.float32)
    params["out_b"] = 0.1 * jax.random.normal(keys[k + 1], (1, 1), jnp.float32)
    return params


def mlp_reference(user_indices, item_indices, params):
    """Pure-JAX f32 reference matching the PyTorch forward."""
    u = jnp.take(params["embedding_user"], user_indices, axis=0)
    i = jnp.take(params["embedding_item"], item_indices, axis=0)
    vec = jnp.concatenate([u, i], axis=-1)
    for w, b in params["fc"]:
        vec = jax.nn.relu(vec @ w + b)
    logits = vec @ params["out_w"] + params["out_b"]
    return jax.nn.sigmoid(logits)


if __name__ == "__main__":
    n_users, n_items = 100, 200
    latent_dim = 16
    layers = [2 * latent_dim, 32, 16, 8]   # layers[0] must equal 2 * latent_dim
    batch = 300                            # exercises padding + 2 batch tiles

    key = jax.random.PRNGKey(0)
    kp, ku, ki = jax.random.split(key, 3)
    params = init_params(kp, n_users, n_items, latent_dim, layers)
    user_indices = jax.random.randint(ku, (batch,), 0, n_users, jnp.int32)
    item_indices = jax.random.randint(ki, (batch,), 0, n_items, jnp.int32)

    rating = mlp_forward(user_indices, item_indices, params)
    jax.block_until_ready(rating)

    ref = mlp_reference(user_indices, item_indices, params)
    assert rating.shape == (batch, 1)
    # bf16 data path (incl. fc[0] folded into the tables) vs f32 reference.
    assert bool(jnp.allclose(rating, ref, atol=1e-2, rtol=0.0)), (
        float(jnp.max(jnp.abs(rating - ref))))

    print("KERNEL_OK")
</pallas_src>

<mosaic_0001>
module attributes {stable_mosaic.version = 11 : i64} {
  func.func @_mlp_kernel(%arg0: i32, %arg1: memref<1x256xi32, #tpu.memory_space<vmem>>, %arg2: memref<1x256xi32, #tpu.memory_space<vmem>>, %arg3: memref<32x100xbf16, #tpu.memory_space<vmem>>, %arg4: memref<32x200xbf16, #tpu.memory_space<vmem>>, %arg5: memref<32x1xf32, #tpu.memory_space<vmem>>, %arg6: memref<16x32xbf16, #tpu.memory_space<vmem>>, %arg7: memref<16x1xf32, #tpu.memory_space<vmem>>, %arg8: memref<8x16xbf16, #tpu.memory_space<vmem>>, %arg9: memref<8x1xf32, #tpu.memory_space<vmem>>, %arg10: memref<8x1xf32, #tpu.memory_space<vmem>>, %arg11: memref<1x1xf32, #tpu.memory_space<vmem>>, %arg12: memref<1x256xf32, #tpu.memory_space<vmem>>) attributes {dimension_semantics = [#tpu.dimension_semantics<parallel>], iteration_bounds = array<i64: 2>, scalar_prefetch = 0 : i64, scratch_operands = 0 : i64, tpu.core_type = #tpu.core_type<tc>, window_params = [{transform_indices = @transform_0, window_bounds = array<i64: 1, 256>}, {transform_indices = @transform_1, window_bounds = array<i64: 1, 256>}, {pipeline_mode = #tpu.pipeline_mode<synchronous>, transform_indices = @transform_2, window_bounds = array<i64: 32, 100>}, {pipeline_mode = #tpu.pipeline_mode<synchronous>, transform_indices = @transform_3, window_bounds = array<i64: 32, 200>}, {pipeline_mode = #tpu.pipeline_mode<synchronous>, transform_indices = @transform_4, window_bounds = array<i64: 32, 1>}, {pipeline_mode = #tpu.pipeline_mode<synchronous>, transform_indices = @transform_5, window_bounds = array<i64: 16, 32>}, {pipeline_mode = #tpu.pipeline_mode<synchronous>, transform_indices = @transform_6, window_bounds = array<i64: 16, 1>}, {pipeline_mode = #tpu.pipeline_mode<synchronous>, transform_indices = @transform_7, window_bounds = array<i64: 8, 16>}, {pipeline_mode = #tpu.pipeline_mode<synchronous>, transform_indices = @transform_8, window_bounds = array<i64: 8, 1>}, {pipeline_mode = #tpu.pipeline_mode<synchronous>, transform_indices = @transform_9, window_bounds = array<i64: 8, 1>}, {pipeline_mode = #tpu.pipeline_mode<synchronous>, transform_indices = @transform_10, window_bounds = array<i64: 1, 1>}, {transform_indices = @transform_11, window_bounds = array<i64: 1, 256>}]} {
    %c0 = arith.constant 0 : index
    %c0_0 = arith.constant 0 : index
    %0 = vector.load %arg1[%c0, %c0_0] : memref<1x256xi32, #tpu.memory_space<vmem>>, vector<1x256xi32>
    %c0_1 = arith.constant 0 : index
    %c0_2 = arith.constant 0 : index
    %1 = vector.load %arg2[%c0_1, %c0_2] : memref<1x256xi32, #tpu.memory_space<vmem>>, vector<1x256xi32>
    %2 = tpu.iota {dimensions = array<i32: 0>} : vector<100x256xi32>
    %3 = vector.broadcast %0 : vector<1x256xi32> to vector<100x256xi32>
    %4 = arith.cmpi eq, %2, %3 : vector<100x256xi32>
    %5 = arith.extui %4 : vector<100x256xi1> to vector<100x256xi32>
    %6 = arith.sitofp %5 : vector<100x256xi32> to vector<100x256xf32>
    %7 = arith.truncf %6 : vector<100x256xf32> to vector<100x256xbf16>
    %8 = tpu.iota {dimensions = array<i32: 0>} : vector<200x256xi32>
    %9 = vector.broadcast %1 : vector<1x256xi32> to vector<200x256xi32>
    %10 = arith.cmpi eq, %8, %9 : vector<200x256xi32>
    %11 = arith.extui %10 : vector<200x256xi1> to vector<200x256xi32>
    %12 = arith.sitofp %11 : vector<200x256xi32> to vector<200x256xf32>
    %13 = arith.truncf %12 : vector<200x256xf32> to vector<200x256xbf16>
    %c0_3 = arith.constant 0 : index
    %c0_4 = arith.constant 0 : index
    %14 = vector.load %arg5[%c0_3, %c0_4] : memref<32x1xf32, #tpu.memory_space<vmem>>, vector<32x1xf32>
    %c0_5 = arith.constant 0 : index
    %c0_6 = arith.constant 0 : index
    %15 = vector.load %arg3[%c0_5, %c0_6] : memref<32x100xbf16, #tpu.memory_space<vmem>>, vector<32x100xbf16>
    %cst = arith.constant dense<0.000000e+00> : vector<32x256xf32>
    %16 = tpu.matmul %15, %7, %cst {dimension_numbers = #tpu.dot_dimension_numbers<[1], [0], [0], [1], [0, 0, 1, 1], [], []>} : vector<32x100xbf16>, vector<100x256xbf16>, vector<32x256xf32> -> vector<32x256xf32>
    %c0_7 = arith.constant 0 : index
    %c0_8 = arith.constant 0 : index
    %17 = vector.load %arg4[%c0_7, %c0_8] : memref<32x200xbf16, #tpu.memory_space<vmem>>, vector<32x200xbf16>
    %cst_9 = arith.constant dense<0.000000e+00> : vector<32x256xf32>
    %18 = tpu.matmul %17, %13, %cst_9 {dimension_numbers = #tpu.dot_dimension_numbers<[1], [0], [0], [1], [0, 0, 1, 1], [], []>} : vector<32x200xbf16>, vector<200x256xbf16>, vector<32x256xf32> -> vector<32x256xf32>
    %19 = arith.addf %16, %18 : vector<32x256xf32>
    %20 = vector.broadcast %14 : vector<32x1xf32> to vector<32x256xf32>
    %21 = arith.addf %19, %20 : vector<32x256xf32>
    %cst_10 = arith.constant 0.000000e+00 : f32
    %22 = vector.broadcast %cst_10 : f32 to vector<32x256xf32>
    %23 = arith.maximumf %21, %22 : vector<32x256xf32>
    %c0_11 = arith.constant 0 : index
    %c0_12 = arith.constant 0 : index
    %24 = vector.load %arg6[%c0_11, %c0_12] : memref<16x32xbf16, #tpu.memory_space<vmem>>, vector<16x32xbf16>
    %c0_13 = arith.constant 0 : index
    %c0_14 = arith.constant 0 : index
    %25 = vector.load %arg7[%c0_13, %c0_14] : memref<16x1xf32, #tpu.memory_space<vmem>>, vector<16x1xf32>
    %26 = arith.truncf %23 : vector<32x256xf32> to vector<32x256xbf16>
    %cst_15 = arith.constant dense<0.000000e+00> : vector<16x256xf32>
    %27 = tpu.matmul %24, %26, %cst_15 {dimension_numbers = #tpu.dot_dimension_numbers<[1], [0], [0], [1], [0, 0, 1, 1], [], []>} : vector<16x32xbf16>, vector<32x256xbf16>, vector<16x256xf32> -> vector<16x256xf32>
    %28 = vector.broadcast %25 : vector<16x1xf32> to vector<16x256xf32>
    %29 = arith.addf %27, %28 : vector<16x256xf32>
    %cst_16 = arith.constant 0.000000e+00 : f32
    %30 = vector.broadcast %cst_16 : f32 to vector<16x256xf32>
    %31 = arith.maximumf %29, %30 : vector<16x256xf32>
    %c0_17 = arith.constant 0 : index
    %c0_18 = arith.constant 0 : index
    %32 = vector.load %arg8[%c0_17, %c0_18] : memref<8x16xbf16, #tpu.memory_space<vmem>>, vector<8x16xbf16>
    %c0_19 = arith.constant 0 : index
    %c0_20 = arith.constant 0 : index
    %33 = vector.load %arg9[%c0_19, %c0_20] : memref<8x1xf32, #tpu.memory_space<vmem>>, vector<8x1xf32>
    %34 = arith.truncf %31 : vector<16x256xf32> to vector<16x256xbf16>
    %cst_21 = arith.constant dense<0.000000e+00> : vector<8x256xf32>
    %35 = tpu.matmul %32, %34, %cst_21 {dimension_numbers = #tpu.dot_dimension_numbers<[1], [0], [0], [1], [0, 0, 1, 1], [], []>} : vector<8x16xbf16>, vector<16x256xbf16>, vector<8x256xf32> -> vector<8x256xf32>
    %36 = vector.broadcast %33 : vector<8x1xf32> to vector<8x256xf32>
    %37 = arith.addf %35, %36 : vector<8x256xf32>
    %cst_22 = arith.constant 0.000000e+00 : f32
    %38 = vector.broadcast %cst_22 : f32 to vector<8x256xf32>
    %39 = arith.maximumf %37, %38 : vector<8x256xf32>
    %c0_23 = arith.constant 0 : index
    %c0_24 = arith.constant 0 : index
    %40 = vector.load %arg10[%c0_23, %c0_24] : memref<8x1xf32, #tpu.memory_space<vmem>>, vector<8x1xf32>
    %c0_25 = arith.constant 0 : index
    %c0_26 = arith.constant 0 : index
    %41 = vector.load %arg11[%c0_25, %c0_26] : memref<1x1xf32, #tpu.memory_space<vmem>>, vector<1x1xf32>
    %42 = vector.broadcast %40 : vector<8x1xf32> to vector<8x256xf32>
    %43 = arith.mulf %42, %39 : vector<8x256xf32>
    %cst_27 = arith.constant dense<0.000000e+00> : vector<256xf32>
    %44 = vector.multi_reduction <add>, %43, %cst_27 [0] : vector<8x256xf32> to vector<256xf32>
    %45 = vector.shape_cast %44 : vector<256xf32> to vector<1x256xf32>
    %46 = vector.broadcast %41 : vector<1x1xf32> to vector<1x256xf32>
    %47 = arith.addf %45, %46 : vector<1x256xf32>
    %48 = arith.negf %47 : vector<1x256xf32>
    %49 = math.exp %48 : vector<1x256xf32>
    %cst_28 = arith.constant 1.000000e+00 : f32
    %50 = vector.broadcast %cst_28 : f32 to vector<1x256xf32>
    %51 = arith.addf %50, %49 : vector<1x256xf32>
    %52 = arith.divf %50, %51 : vector<1x256xf32>
    %c0_29 = arith.constant 0 : index
    %c0_30 = arith.constant 0 : index
    %53 = vector.load %arg12[%c0_29, %c0_30] : memref<1x256xf32, #tpu.memory_space<vmem>>, vector<1x256xf32>
    tpu.vector_store %arg12[%c0_29, %c0_30], %52 {strides = array<i32>} : memref<1x256xf32, #tpu.memory_space<vmem>>, vector<1x256xf32>,
    return
  }
  func.func @transform_0(%arg0: i32) -> (i32, i32) {
    %c0_i32 = arith.constant 0 : i32
    %c0_i32_0 = arith.constant 0 : i32
    return %c0_i32, %arg0 : i32, i32
  }
  func.func @transform_1(%arg0: i32) -> (i32, i32) {
    %c0_i32 = arith.constant 0 : i32
    %c0_i32_0 = arith.constant 0 : i32
    return %c0_i32, %arg0 : i32, i32
  }
  func.func @transform_2(%arg0: i32) -> (i32, i32) {
    %c0_i32 = arith.constant 0 : i32
    %c0_i32_0 = arith.constant 0 : i32
    %c0_i32_1 = arith.constant 0 : i32
    return %c0_i32, %c0_i32_0 : i32, i32
  }
  func.func @transform_3(%arg0: i32) -> (i32, i32) {
    %c0_i32 = arith.constant 0 : i32
    %c0_i32_0 = arith.constant 0 : i32
    %c0_i32_1 = arith.constant 0 : i32
    return %c0_i32, %c0_i32_0 : i32, i32
  }
  func.func @transform_4(%arg0: i32) -> (i32, i32) {
    %c0_i32 = arith.constant 0 : i32
    %c0_i32_0 = arith.constant 0 : i32
    %c0_i32_1 = arith.constant 0 : i32
    return %c0_i32, %c0_i32_0 : i32, i32
  }
  func.func @transform_5(%arg0: i32) -> (i32, i32) {
    %c0_i32 = arith.constant 0 : i32
    %c0_i32_0 = arith.constant 0 : i32
    %c0_i32_1 = arith.constant 0 : i32
    return %c0_i32, %c0_i32_0 : i32, i32
  }
  func.func @transform_6(%arg0: i32) -> (i32, i32) {
    %c0_i32 = arith.constant 0 : i32
    %c0_i32_0 = arith.constant 0 : i32
    %c0_i32_1 = arith.constant 0 : i32
    return %c0_i32, %c0_i32_0 : i32, i32
  }
  func.func @transform_7(%arg0: i32) -> (i32, i32) {
    %c0_i32 = arith.constant 0 : i32
    %c0_i32_0 = arith.constant 0 : i32
    %c0_i32_1 = arith.constant 0 : i32
    return %c0_i32, %c0_i32_0 : i32, i32
  }
  func.func @transform_8(%arg0: i32) -> (i32, i32) {
    %c0_i32 = arith.constant 0 : i32
    %c0_i32_0 = arith.constant 0 : i32
    %c0_i32_1 = arith.constant 0 : i32
    return %c0_i32, %c0_i32_0 : i32, i32
  }
  func.func @transform_9(%arg0: i32) -> (i32, i32) {
    %c0_i32 = arith.constant 0 : i32
    %c0_i32_0 = arith.constant 0 : i32
    %c0_i32_1 = arith.constant 0 : i32
    return %c0_i32, %c0_i32_0 : i32, i32
  }
  func.func @transform_10(%arg0: i32) -> (i32, i32) {
    %c0_i32 = arith.constant 0 : i32
    %c0_i32_0 = arith.constant 0 : i32
    %c0_i32_1 = arith.constant 0 : i32
    return %c0_i32, %c0_i32_0 : i32, i32
  }
  func.func @transform_11(%arg0: i32) -> (i32, i32) {
    %c0_i32 = arith.constant 0 : i32
    %c0_i32_0 = arith.constant 0 : i32
    return %c0_i32, %arg0 : i32, i32
  }
}

</mosaic_0001>

<llo_original>
// kernel: tpu_custom_call.1
$region0: #{tpu_custom_call.1}
  #allocation0 [shape = 'u32[]', space=smem, size = 0x4, offset = 0x4, fixed_abs, tag = 'smem constant byte address 0x4 - core index']
  #allocation1 [shape = 'u32[144,128]{1,0:T(1,128)}', space=vmem, size = 0x12000, scoped, tag = 'internal scratch']
  #allocation2 [shape = 'f32[1,1]{1,0:T(1,128)S(1)}', space=vmem, size = 0x200, scoped, tag = 'scoped memory for tpu_custom_call.1']
  %s0 = inlined_call_operand.vmem [shape: s32[1,512], index: 0, kind: input, shape index: {}]
  %s1 = inlined_call_operand.vmem [shape: s32[1,512], index: 1, kind: input, shape index: {}]
  %s2 = inlined_call_operand.vmem [shape: bf16[32,100], index: 2, kind: input, shape index: {}]
  %s3 = inlined_call_operand.vmem [shape: bf16[32,200], index: 3, kind: input, shape index: {}]
  %s4 = inlined_call_operand.vmem [shape: f32[32,1], index: 4, kind: input, shape index: {}]
  %s5 = inlined_call_operand.vmem [shape: bf16[16,32], index: 5, kind: input, shape index: {}]
  %s6 = inlined_call_operand.vmem [shape: f32[16,1], index: 6, kind: input, shape index: {}]
  %s7 = inlined_call_operand.vmem [shape: bf16[8,16], index: 7, kind: input, shape index: {}]
  %s8 = inlined_call_operand.vmem [shape: f32[8,1], index: 8, kind: input, shape index: {}]
  %s9 = inlined_call_operand.vmem [shape: f32[8,1], index: 9, kind: input, shape index: {}]
  %s10 = inlined_call_operand.<no memory space> [shape: f32[1,1], index: 10, kind: input, shape index: {}]
  %s11 = inlined_call_operand.hbm [shape: f32[1,512], index: 11, kind: output, shape index: {}]
  %s12 = sld [smem:[#allocation0]]
  $region77: #{tpu_custom_call.1} parent=0
    _
  %s14 = ssub.s32 1, %s12
  %s15 = scalar_select 0, %s14, %s12
  %v16 = vstv %s10
  %17 = vst [vmem:[#allocation2] sm:$0x1] %v16
  $region1: #{tpu_custom_call.1} parent=0
    #allocation3 [shape = 'u8[2048]{0}', space=vmem, size = 0x800, scoped, tag = 'output window, operand 0']
    #allocation4 [shape = 's32[2]{0}', space=sflag, size = 0x8, scoped, tag = 'scoped memory for tpu_custom_call.1']
    %18 = vsyncpa [#allocation4], 0
    %s19 = scalar_lea.sflag [#allocation4], 1
    %20 = vsyncpa %s19, 0
    loop: start=0, step=1, limit=4
    $region2: #{tpu_custom_call.1} parent=1 // loop_pre_header
      _
    $region3: #{tpu_custom_call.1} parent=1 // loop_header
      %s22 = sphi 0, %s26
      %p23 = scmp.ge.s32.totalorder %s22, 4
      %s32 = sphi 0, %s34
      %s35 = sphi 0, %s32
      %s36 = sphi 0, %s35
      %s52 = sphi 0, %s36
      %s58 = sphi 0, %s60
      %s61 = sphi 0, %s58
      %s62 = sphi 0, %s61
      %s78 = sphi 0, %s62
      %s82 = sphi 0, %s82
      %s84 = sphi 0, %s82
      %s85 = sphi 0, %s84
      %s99 = sphi 0, %s85
      %s103 = sphi 0, %s103
      %s105 = sphi 0, %s103
      %s106 = sphi 0, %s105
      %s120 = sphi 0, %s106
      %s124 = sphi 0, %s124
      %s126 = sphi 0, %s124
      %s127 = sphi 0, %s126
      %s141 = sphi 0, %s127
      %s145 = sphi 0, %s145
      %s147 = sphi 0, %s145
      %s148 = sphi 0, %s147
      %s162 = sphi 0, %s148
      %s166 = sphi 0, %s166
      %s168 = sphi 0, %s166
      %s169 = sphi 0, %s168
      %s183 = sphi 0, %s169
      %s187 = sphi 0, %s187
      %s189 = sphi 0, %s187
      %s190 = sphi 0, %s189
      %s204 = sphi 0, %s190
      %s208 = sphi 0, %s208
      %s210 = sphi 0, %s208
      %s211 = sphi 0, %s210
      %s225 = sphi 0, %s211
      %s229 = sphi 0, %s229
      %s231 = sphi 0, %s229
      %s232 = sphi 0, %s231
      %s246 = sphi 0, %s232
      %s250 = sphi 0, %s250
      %s252 = sphi 0, %s250
      %s253 = sphi 0, %s252
      %s267 = sphi 0, %s253
      %s273 = sphi 0, %s275
      %s276 = sphi 0, %s273
      %s277 = sphi 0, %s276
      %s293 = sphi 0, %s277
    $region4: #{tpu_custom_call.1} parent=1 // loop_header_branch
      %25 = sbr.rel (%p23) target = $region8
    $region5: #{tpu_custom_call.1} parent=1 // loop_body
      %s27 = ssub.s32 %s22, 1
      %s28 = ssub.s32 %s22, 2
      %s29 = sadd.s32 %s22, 1
      %s30 = ssub.s32 %s22, %s29
      %p31 = scmp.eq.s32.totalorder %s30, 0
      %s33 = sadd.s32 %s32, 1
      %s34 = scalar_select %p31, %s32, %s33
      %p37 = pneg %p31
      %p38 = scmp.eq.s32.totalorder %s22, 1
      %p39 = por %p37, %p38
      %p40 = scmp.ne.s32.totalorder %s32, %s35
      %p41 = scmp.eq.s32.totalorder %s22, 0
      %p42 = por %p40, %p41
      %p43 = scmp.ne.s32.totalorder %s32, %s35
      %p44 = scmp.eq.s32.totalorder %s27, 1
      %p45 = por %p43, %p44
      %p46 = scmp.ne.s32.totalorder %s35, %s36
      %p47 = scmp.eq.s32.totalorder %s27, 0
      %p48 = por %p46, %p47
      %p49 = scmp.ne.s32.totalorder %s35, %s36
      %p50 = scmp.eq.s32.totalorder %s28, 1
      %p51 = por %p49, %p50
      %p53 = scmp.ne.s32.totalorder %s36, %s52
      %p54 = scmp.eq.s32.totalorder %s28, 0
      %p55 = por %p53, %p54
      %s56 = ssub.s32 %s22, %s29
      %p57 = scmp.eq.s32.totalorder %s56, 0
      %s59 = sadd.s32 %s58, 1
      %s60 = scalar_select %p57, %s58, %s59
      %p63 = pneg %p57
      %p64 = scmp.eq.s32.totalorder %s22, 1
      %p65 = por %p63, %p64
      %p66 = scmp.ne.s32.totalorder %s58, %s61
      %p67 = scmp.eq.s32.totalorder %s22, 0
      %p68 = por %p66, %p67
      %p69 = scmp.ne.s32.totalorder %s58, %s61
      %p70 = scmp.eq.s32.totalorder %s27, 1
      %p71 = por %p69, %p70
      %p72 = scmp.ne.s32.totalorder %s61, %s62
      %p73 = scmp.eq.s32.totalorder %s27, 0
      %p74 = por %p72, %p73
      %p75 = scmp.ne.s32.totalorder %s61, %s62
      %p76 = scmp.eq.s32.totalorder %s28, 1
      %p77 = por %p75, %p76
      %p79 = scmp.ne.s32.totalorder %s62, %s78
      %p80 = scmp.eq.s32.totalorder %s28, 0
      %p81 = por %p79, %p80
      %s83 = sadd.s32 %s82, 1
      %p86 = scmp.eq.s32.totalorder %s22, 1
      %p87 = scmp.ne.s32.totalorder %s82, %s84
      %p88 = scmp.eq.s32.totalorder %s22, 0
      %p89 = por %p87, %p88
      %p90 = scmp.ne.s32.totalorder %s82, %s84
      %p91 = scmp.eq.s32.totalorder %s27, 1
      %p92 = por %p90, %p91
      %p93 = scmp.ne.s32.totalorder %s84, %s85
      %p94 = scmp.eq.s32.totalorder %s27, 0
      %p95 = por %p93, %p94
      %p96 = scmp.ne.s32.totalorder %s84, %s85
      %p97 = scmp.eq.s32.totalorder %s28, 1
      %p98 = por %p96, %p97
      %p100 = scmp.ne.s32.totalorder %s85, %s99
      %p101 = scmp.eq.s32.totalorder %s28, 0
      %p102 = por %p100, %p101
      %s104 = sadd.s32 %s103, 1
      %p107 = scmp.eq.s32.totalorder %s22, 1
      %p108 = scmp.ne.s32.totalorder %s103, %s105
      %p109 = scmp.eq.s32.totalorder %s22, 0
      %p110 = por %p108, %p109
      %p111 = scmp.ne.s32.totalorder %s103, %s105
      %p112 = scmp.eq.s32.totalorder %s27, 1
      %p113 = por %p111, %p112
      %p114 = scmp.ne.s32.totalorder %s105, %s106
      %p115 = scmp.eq.s32.totalorder %s27, 0
      %p116 = por %p114, %p115
      %p117 = scmp.ne.s32.totalorder %s105, %s106
      %p118 = scmp.eq.s32.totalorder %s28, 1
      %p119 = por %p117, %p118
      %p121 = scmp.ne.s32.totalorder %s106, %s120
      %p122 = scmp.eq.s32.totalorder %s28, 0
      %p123 = por %p121, %p122
      %s125 = sadd.s32 %s124, 1
      %p128 = scmp.eq.s32.totalorder %s22, 1
      %p129 = scmp.ne.s32.totalorder %s124, %s126
      %p130 = scmp.eq.s32.totalorder %s22, 0
      %p131 = por %p129, %p130
      %p132 = scmp.ne.s32.totalorder %s124, %s126
      %p133 = scmp.eq.s32.totalorder %s27, 1
      %p134 = por %p132, %p133
      %p135 = scmp.ne.s32.totalorder %s126, %s127
      %p136 = scmp.eq.s32.totalorder %s27, 0
      %p137 = por %p135, %p136
      %p138 = scmp.ne.s32.totalorder %s126, %s127
      %p139 = scmp.eq.s32.totalorder %s28, 1
      %p140 = por %p138, %p139
      %p142 = scmp.ne.s32.totalorder %s127, %s141
      %p143 = scmp.eq.s32.totalorder %s28, 0
      %p144 = por %p142, %p143
      %s146 = sadd.s32 %s145, 1
      %p149 = scmp.eq.s32.totalorder %s22, 1
      %p150 = scmp.ne.s32.totalorder %s145, %s147
      %p151 = scmp.eq.s32.totalorder %s22, 0
      %p152 = por %p150, %p151
      %p153 = scmp.ne.s32.totalorder %s145, %s147
      %p154 = scmp.eq.s32.totalorder %s27, 1
      %p155 = por %p153, %p154
      %p156 = scmp.ne.s32.totalorder %s147, %s148
      %p157 = scmp.eq.s32.totalorder %s27, 0
      %p158 = por %p156, %p157
      %p159 = scmp.ne.s32.totalorder %s147, %s148
      %p160 = scmp.eq.s32.totalorder %s28, 1
      %p161 = por %p159, %p160
      %p163 = scmp.ne.s32.totalorder %s148, %s162
      %p164 = scmp.eq.s32.totalorder %s28, 0
      %p165 = por %p163, %p164
      %s167 = sadd.s32 %s166, 1
      %p170 = scmp.eq.s32.totalorder %s22, 1
      %p171 = scmp.ne.s32.totalorder %s166, %s168
      %p172 = scmp.eq.s32.totalorder %s22, 0
      %p173 = por %p171, %p172
      %p174 = scmp.ne.s32.totalorder %s166, %s168
      %p175 = scmp.eq.s32.totalorder %s27, 1
      %p176 = por %p174, %p175
      %p177 = scmp.ne.s32.totalorder %s168, %s169
      %p178 = scmp.eq.s32.totalorder %s27, 0
      %p179 = por %p177, %p178
      %p180 = scmp.ne.s32.totalorder %s168, %s169
      %p181 = scmp.eq.s32.totalorder %s28, 1
      %p182 = por %p180, %p181
      %p184 = scmp.ne.s32.totalorder %s169, %s183
      %p185 = scmp.eq.s32.totalorder %s28, 0
      %p186 = por %p184, %p185
      %s188 = sadd.s32 %s187, 1
      %p191 = scmp.eq.s32.totalorder %s22, 1
      %p192 = scmp.ne.s32.totalorder %s187, %s189
      %p193 = scmp.eq.s32.totalorder %s22, 0
      %p194 = por %p192, %p193
      %p195 = scmp.ne.s32.totalorder %s187, %s189
      %p196 = scmp.eq.s32.totalorder %s27, 1
      %p197 = por %p195, %p196
      %p198 = scmp.ne.s32.totalorder %s189, %s190
      %p199 = scmp.eq.s32.totalorder %s27, 0
      %p200 = por %p198, %p199
      %p201 = scmp.ne.s32.totalorder %s189, %s190
      %p202 = scmp.eq.s32.totalorder %s28, 1
      %p203 = por %p201, %p202
      %p205 = scmp.ne.s32.totalorder %s190, %s204
      %p206 = scmp.eq.s32.totalorder %s28, 0
      %p207 = por %p205, %p206
      %s209 = sadd.s32 %s208, 1
      %p212 = scmp.eq.s32.totalorder %s22, 1
      %p213 = scmp.ne.s32.totalorder %s208, %s210
      %p214 = scmp.eq.s32.totalorder %s22, 0
      %p215 = por %p213, %p214
      %p216 = scmp.ne.s32.totalorder %s208, %s210
      %p217 = scmp.eq.s32.totalorder %s27, 1
      %p218 = por %p216, %p217
      %p219 = scmp.ne.s32.totalorder %s210, %s211
      %p220 = scmp.eq.s32.totalorder %s27, 0
      %p221 = por %p219, %p220
      %p222 = scmp.ne.s32.totalorder %s210, %s211
      %p223 = scmp.eq.s32.totalorder %s28, 1
      %p224 = por %p222, %p223
      %p226 = scmp.ne.s32.totalorder %s211, %s225
      %p227 = scmp.eq.s32.totalorder %s28, 0
      %p228 = por %p226, %p227
      %s230 = sadd.s32 %s229, 1
      %p233 = scmp.eq.s32.totalorder %s22, 1
      %p234 = scmp.ne.s32.totalorder %s229, %s231
      %p235 = scmp.eq.s32.totalorder %s22, 0
      %p236 = por %p234, %p235
      %p237 = scmp.ne.s32.totalorder %s229, %s231
      %p238 = scmp.eq.s32.totalorder %s27, 1
      %p239 = por %p237, %p238
      %p240 = scmp.ne.s32.totalorder %s231, %s232
      %p241 = scmp.eq.s32.totalorder %s27, 0
      %p242 = por %p240, %p241
      %p243 = scmp.ne.s32.totalorder %s231, %s232
      %p244 = scmp.eq.s32.totalorder %s28, 1
      %p245 = por %p243, %p244
      %p247 = scmp.ne.s32.totalorder %s232, %s246
      %p248 = scmp.eq.s32.totalorder %s28, 0
      %p249 = por %p247, %p248
      %s251 = sadd.s32 %s250, 1
      %p254 = scmp.eq.s32.totalorder %s22, 1
      %p255 = scmp.ne.s32.totalorder %s250, %s252
      %p256 = scmp.eq.s32.totalorder %s22, 0
      %p257 = por %p255, %p256
      %p258 = scmp.ne.s32.totalorder %s250, %s252
      %p259 = scmp.eq.s32.totalorder %s27, 1
      %p260 = por %p258, %p259
      %p261 = scmp.ne.s32.totalorder %s252, %s253
      %p262 = scmp.eq.s32.totalorder %s27, 0
      %p263 = por %p261, %p262
      %p264 = scmp.ne.s32.totalorder %s252, %s253
      %p265 = scmp.eq.s32.totalorder %s28, 1
      %p266 = por %p264, %p265
      %p268 = scmp.ne.s32.totalorder %s253, %s267
      %p269 = scmp.eq.s32.totalorder %s28, 0
      %p270 = por %p268, %p269
      %s271 = ssub.s32 %s22, %s29
      %p272 = scmp.eq.s32.totalorder %s271, 0
      %s274 = sadd.s32 %s273, 1
      %s275 = scalar_select %p272, %s273, %s274
      %p278 = pneg %p272
      %p279 = scmp.eq.s32.totalorder %s22, 1
      %p280 = por %p278, %p279
      %p281 = scmp.ne.s32.totalorder %s273, %s276
      %p282 = scmp.eq.s32.totalorder %s22, 0
      %p283 = por %p281, %p282
      %p284 = scmp.ne.s32.totalorder %s273, %s276
      %p285 = scmp.eq.s32.totalorder %s27, 1
      %p286 = por %p284, %p285
      %p287 = scmp.ne.s32.totalorder %s276, %s277
      %p288 = scmp.eq.s32.totalorder %s27, 0
      %p289 = por %p287, %p288
      %p290 = scmp.ne.s32.totalorder %s276, %s277
      %p291 = scmp.eq.s32.totalorder %s28, 1
      %p292 = por %p290, %p291
      %p294 = scmp.ne.s32.totalorder %s277, %s293
      %p295 = scmp.eq.s32.totalorder %s28, 0
      %p296 = por %p294, %p295
      %p297 = scmp.le.s32.totalorder 1, %s22
      %p298 = scmp.lt.s32.totalorder %s22, 3
      %p299 = pnand %p297, %p298
      %p300 = pneg %p299
      // Predicated region
      $region9: #{tpu_custom_call.1} parent=5 // pred_check
        _
      $region10: #{tpu_custom_call.1} parent=5 // pred_check_branch
        %302 = sbr.rel (%p299) target = $region12
      $region11: #{tpu_custom_call.1} parent=5 // pred_region
        %s303 = ssub.s32 %s22, 1
        // Predicated region
        $region13: #{tpu_custom_call.1} parent=11 // pred_check
          %p304 = pneg %p95
        $region14: #{tpu_custom_call.1} parent=11 // pred_check_branch
          %306 = sbr.rel (%p304) target = $region16
        $region15: #{tpu_custom_call.1} parent=11 // pred_region
          _
        $region16: #{tpu_custom_call.1} parent=11 // pred_fallthru
          _
        // Predicated region
        $region17: #{tpu_custom_call.1} parent=11 // pred_check
          %p307 = pneg %p116
        $region18: #{tpu_custom_call.1} parent=11 // pred_check_branch
          %309 = sbr.rel (%p307) target = $region20
        $region19: #{tpu_custom_call.1} parent=11 // pred_region
          _
        $region20: #{tpu_custom_call.1} parent=11 // pred_fallthru
          _
        // Predicated region
        $region21: #{tpu_custom_call.1} parent=11 // pred_check
          %p310 = pneg %p137
        $region22: #{tpu_custom_call.1} parent=11 // pred_check_branch
          %312 = sbr.rel (%p310) target = $region24
        $region23: #{tpu_custom_call.1} parent=11 // pred_region
          _
        $region24: #{tpu_custom_call.1} parent=11 // pred_fallthru
          _
        // Predicated region
        $region25: #{tpu_custom_call.1} parent=11 // pred_check
          %p313 = pneg %p158
        $region26: #{tpu_custom_call.1} parent=11 // pred_check_branch
          %315 = sbr.rel (%p313) target = $region28
        $region27: #{tpu_custom_call.1} parent=11 // pred_region
          _
        $region28: #{tpu_custom_call.1} parent=11 // pred_fallthru
          _
        // Predicated region
        $region29: #{tpu_custom_call.1} parent=11 // pred_check
          %p316 = pneg %p179
        $region30: #{tpu_custom_call.1} parent=11 // pred_check_branch
          %318 = sbr.rel (%p316) target = $region32
        $region31: #{tpu_custom_call.1} parent=11 // pred_region
          _
        $region32: #{tpu_custom_call.1} parent=11 // pred_fallthru
          _
        // Predicated region
        $region33: #{tpu_custom_call.1} parent=11 // pred_check
          %p319 = pneg %p200
        $region34: #{tpu_custom_call.1} parent=11 // pred_check_branch
          %321 = sbr.rel (%p319) target = $region36
        $region35: #{tpu_custom_call.1} parent=11 // pred_region
          _
        $region36: #{tpu_custom_call.1} parent=11 // pred_fallthru
          _
        // Predicated region
        $region37: #{tpu_custom_call.1} parent=11 // pred_check
          %p322 = pneg %p221
        $region38: #{tpu_custom_call.1} parent=11 // pred_check_branch
          %324 = sbr.rel (%p322) target = $region40
        $region39: #{tpu_custom_call.1} parent=11 // pred_region
          _
        $region40: #{tpu_custom_call.1} parent=11 // pred_fallthru
          _
        // Predicated region
        $region41: #{tpu_custom_call.1} parent=11 // pred_check
          %p325 = pneg %p242
        $region42: #{tpu_custom_call.1} parent=11 // pred_check_branch
          %327 = sbr.rel (%p325) target = $region44
        $region43: #{tpu_custom_call.1} parent=11 // pred_region
          _
        $region44: #{tpu_custom_call.1} parent=11 // pred_fallthru
          _
        // Predicated region
        $region45: #{tpu_custom_call.1} parent=11 // pred_check
          %p328 = pneg %p263
        $region46: #{tpu_custom_call.1} parent=11 // pred_check_branch
          %330 = sbr.rel (%p328) target = $region48
        $region47: #{tpu_custom_call.1} parent=11 // pred_region
          _
        $region48: #{tpu_custom_call.1} parent=11 // pred_fallthru
          _
      $region12: #{tpu_custom_call.1} parent=5 // pred_fallthru
        _
      %p331 = scmp.lt.s32.totalorder %s22, 2
      // Predicated region
      $region49: #{tpu_custom_call.1} parent=5 // pred_check
        %p332 = pneg %p331
      $region50: #{tpu_custom_call.1} parent=5 // pred_check_branch
        %334 = sbr.rel (%p332) target = $region52
      $region51: #{tpu_custom_call.1} parent=5 // pred_region
        // Predicated region
        $region53: #{tpu_custom_call.1} parent=51 // pred_check
          %p335 = pneg %p42
        $region54: #{tpu_custom_call.1} parent=51 // pred_check_branch
          %337 = sbr.rel (%p335) target = $region56
        $region55: #{tpu_custom_call.1} parent=51 // pred_region
          %s338 = smul.u32 2, %s22
          %p339 = scmp.lt.s32.totalorder %s338, 3
          %s340 = scalar_select %p339, %s338, 3
          %s341 = scalar_lea.vmem %s0, %s340
          %s342 = smul.u32 2, %s22
        $region56: #{tpu_custom_call.1} parent=51 // pred_fallthru
          _
        // Predicated region
        $region57: #{tpu_custom_call.1} parent=51 // pred_check
          %p343 = pneg %p68
        $region58: #{tpu_custom_call.1} parent=51 // pred_check_branch
          %345 = sbr.rel (%p343) target = $region60
        $region59: #{tpu_custom_call.1} parent=51 // pred_region
          %s346 = smul.u32 2, %s22
          %p347 = scmp.lt.s32.totalorder %s346, 3
          %s348 = scalar_select %p347, %s346, 3
          %s349 = scalar_lea.vmem %s1, %s348
          %s350 = smul.u32 2, %s22
        $region60: #{tpu_custom_call.1} parent=51 // pred_fallthru
          _
      $region52: #{tpu_custom_call.1} parent=5 // pred_fallthru
        _
      %p351 = scmp.le.s32.totalorder 1, %s22
      %p352 = scmp.lt.s32.totalorder %s22, 3
      %p353 = pnand %p351, %p352
      %p354 = pneg %p353
      // Predicated region
      $region61: #{tpu_custom_call.1} parent=5 // pred_check
        _
      $region62: #{tpu_custom_call.1} parent=5 // pred_check_branch
        %356 = sbr.rel (%p353) target = $region64
      $region63: #{tpu_custom_call.1} parent=5 // pred_region
        %s357 = ssub.s32 %s22, 1
        %s358 = smul.u32 2, %s27
        %p359 = scmp.lt.s32.totalorder %s358, 3
        %s360 = scalar_select %p359, %s358, 3
        %s361 = scalar_lea.vmem %s0, %s360
        %p362 = pneg %p48
        %p363 = pneg %p45
        %s364 = smul.u32 2, %s27
        %p365 = scmp.lt.s32.totalorder %s364, 3
        %s366 = scalar_select %p365, %s364, 3
        %s367 = scalar_lea.vmem %s1, %s366
        %p368 = pneg %p74
        %p369 = pneg %p71
        %p370 = pneg %p95
        %p371 = pneg %p92
        %p372 = pneg %p116
        %p373 = pneg %p113
        %p374 = pneg %p137
        %p375 = pneg %p134
        %p376 = pneg %p158
        %p377 = pneg %p155
        %p378 = pneg %p179
        %p379 = pneg %p176
        %p380 = pneg %p200
        %p381 = pneg %p197
        %p382 = pneg %p221
        %p383 = pneg %p218
        %p384 = pneg %p242
        %p385 = pneg %p239
        %p386 = pneg %p263
        %p387 = pneg %p260
        %p388 = pneg %p289
        %p389 = pneg %p286
        %s390 = sand.u32 %s276, 1
        %s391 = scalar_lea.sflag [#allocation4], %s390
        %s392 = sand.u32 %s276, 1
        %s393 = smul.addr %s392, 2
        %s394 = scalar_lea.vmem [#allocation3], %s393
        %s395 = smul.u32 2, %s27
        %p396 = scmp.lt.s32.totalorder %s395, 3
        %s397 = scalar_select %p396, %s395, 3
        %s398 = scalar_lea.vmem %s0, %s397
        %s399 = smul.u32 2, %s27
        %s400 = smul.u32 2, %s27
        %p401 = scmp.lt.s32.totalorder %s400, 3
        %s402 = scalar_select %p401, %s400, 3
        %s403 = scalar_lea.vmem %s1, %s402
        %s404 = smul.u32 2, %s27
        %s405 = smul.u32 2, %s27
        %v407 = vld [vmem:[%s398] sm:$0x3]
        %v408 = vld [vmem:[%s403] sm:$0x3]
        %v409 = vlaneseq
        %v410 = vshrl.u32 %v409, 7
        %v411 = vadd.s32 %v410, 8
        %v412 = vadd.s32 %v410, 16
        %v413 = vadd.s32 %v410, 24
        %v414 = vadd.s32 %v410, 32
        %v415 = vadd.s32 %v410, 40
        %v416 = vadd.s32 %v410, 48
        %v417 = vadd.s32 %v410, 56
        %v418 = vadd.s32 %v410, 64
        %v419 = vadd.s32 %v410, 72
        %v420 = vadd.s32 %v410, 80
        %v421 = vadd.s32 %v410, 88
        %v422 = vadd.s32 %v410, 96
        %v423 = vlaneseq
        %v424 = vshrl.u32 %v423, 7
        %v425 = vsub.s32 0, %v424
        %v426 = vrot.slane %v407, %v425
        %v427 = vlaneseq
        %v428 = vshrl.u32 %v427, 7
        %v429 = vsub.s32 1, %v428
        %v430 = vrot.slane %v407, %v429
        %vm431 = vcmp.eq.s32.totalorder %v410, %v426
        %vm432 = vcmp.eq.s32.totalorder %v410, %v430
        %vm433 = vcmp.eq.s32.totalorder %v411, %v426
        %vm434 = vcmp.eq.s32.totalorder %v411, %v430
        %vm435 = vcmp.eq.s32.totalorder %v412, %v426
        %vm436 = vcmp.eq.s32.totalorder %v412, %v430
        %vm437 = vcmp.eq.s32.totalorder %v413, %v426
        %vm438 = vcmp.eq.s32.totalorder %v413, %v430
        %vm439 = vcmp.eq.s32.totalorder %v414, %v426
        %vm440 = vcmp.eq.s32.totalorder %v414, %v430
        %vm441 = vcmp.eq.s32.totalorder %v415, %v426
        %vm442 = vcmp.eq.s32.totalorder %v415, %v430
        %vm443 = vcmp.eq.s32.totalorder %v416, %v426
        %vm444 = vcmp.eq.s32.totalorder %v416, %v430
        %vm445 = vcmp.eq.s32.totalorder %v417, %v426
        %vm446 = vcmp.eq.s32.totalorder %v417, %v430
        %vm447 = vcmp.eq.s32.totalorder %v418, %v426
        %vm448 = vcmp.eq.s32.totalorder %v418, %v430
        %vm449 = vcmp.eq.s32.totalorder %v419, %v426
        %vm450 = vcmp.eq.s32.totalorder %v419, %v430
        %vm451 = vcmp.eq.s32.totalorder %v420, %v426
        %vm452 = vcmp.eq.s32.totalorder %v420, %v430
        %vm453 = vcmp.eq.s32.totalorder %v421, %v426
        %vm454 = vcmp.eq.s32.totalorder %v421, %v430
        %vm455 = vcmp.eq.s32.totalorder %v422, %v426
        %vm456 = vcmp.eq.s32.totalorder %v422, %v430
        %v457 = vsel %vm431, 1, 0
        %v458 = vsel %vm432, 1, 0
        %v459 = vsel %vm433, 1, 0
        %v460 = vsel %vm434, 1, 0
        %v461 = vsel %vm435, 1, 0
        %v462 = vsel %vm436, 1, 0
        %v463 = vsel %vm437, 1, 0
        %v464 = vsel %vm438, 1, 0
        %v465 = vsel %vm439, 1, 0
        %v466 = vsel %vm440, 1, 0
        %v467 = vsel %vm441, 1, 0
        %v468 = vsel %vm442, 1, 0
        %v469 = vsel %vm443, 1, 0
        %v470 = vsel %vm444, 1, 0
        %v471 = vsel %vm445, 1, 0
        %v472 = vsel %vm446, 1, 0
        %v473 = vsel %vm447, 1, 0
        %v474 = vsel %vm448, 1, 0
        %v475 = vsel %vm449, 1, 0
        %v476 = vsel %vm450, 1, 0
        %v477 = vsel %vm451, 1, 0
        %v478 = vsel %vm452, 1, 0
        %v479 = vsel %vm453, 1, 0
        %v480 = vsel %vm454, 1, 0
        %v481 = vsel %vm455, 1, 0
        %v482 = vsel %vm456, 1, 0
        %v483 = vcvt.s32.f32 %v457
        %v484 = vcvt.s32.f32 %v458
        %v485 = vcvt.s32.f32 %v459
        %v486 = vcvt.s32.f32 %v460
        %v487 = vcvt.s32.f32 %v461
        %v488 = vcvt.s32.f32 %v462
        %v489 = vcvt.s32.f32 %v463
        %v490 = vcvt.s32.f32 %v464
        %v491 = vcvt.s32.f32 %v465
        %v492 = vcvt.s32.f32 %v466
        %v493 = vcvt.s32.f32 %v467
        %v494 = vcvt.s32.f32 %v468
        %v495 = vcvt.s32.f32 %v469
        %v496 = vcvt.s32.f32 %v470
        %v497 = vcvt.s32.f32 %v471
        %v498 = vcvt.s32.f32 %v472
        %v499 = vcvt.s32.f32 %v473
        %v500 = vcvt.s32.f32 %v474
        %v501 = vcvt.s32.f32 %v475
        %v502 = vcvt.s32.f32 %v476
        %v503 = vcvt.s32.f32 %v477
        %v504 = vcvt.s32.f32 %v478
        %v505 = vcvt.s32.f32 %v479
        %v506 = vcvt.s32.f32 %v480
        %v507 = vcvt.s32.f32 %v481
        %v508 = vcvt.s32.f32 %v482
        %v509 = vpack.c.bf16 %v485, %v483
        %v510 = vpack.c.bf16 %v486, %v484
        %v511 = vpack.c.bf16 %v489, %v487
        %v512 = vpack.c.bf16 %v490, %v488
        %v513 = vpack.c.bf16 %v493, %v491
        %v514 = vpack.c.bf16 %v494, %v492
        %v515 = vpack.c.bf16 %v497, %v495
        %v516 = vpack.c.bf16 %v498, %v496
        %v517 = vpack.c.bf16 %v501, %v499
        %v518 = vpack.c.bf16 %v502, %v500
        %v519 = vpack.c.bf16 %v505, %v503
        %v520 = vpack.c.bf16 %v506, %v504
        %v521 = vpack.c.bf16 %v507, %v507
        %v522 = vpack.c.bf16 %v508, %v508
        %v523 = vadd.s32 %v410, 104
        %v524 = vadd.s32 %v410, 112
        %v525 = vadd.s32 %v410, 120
        %v526 = vadd.s32 %v410, 128
        %v527 = vadd.s32 %v410, 136
        %v528 = vadd.s32 %v410, 144
        %v529 = vadd.s32 %v410, 152
        %v530 = vadd.s32 %v410, 160
        %v531 = vadd.s32 %v410, 168
        %v532 = vadd.s32 %v410, 176
        %v533 = vadd.s32 %v410, 184
        %v534 = vadd.s32 %v410, 192
        %v535 = vlaneseq
        %v536 = vshrl.u32 %v535, 7
        %v537 = vsub.s32 0, %v536
        %v538 = vrot.slane %v408, %v537
        %v539 = vlaneseq
        %v540 = vshrl.u32 %v539, 7
        %v541 = vsub.s32 1, %v540
        %v542 = vrot.slane %v408, %v541
        %vm543 = vcmp.eq.s32.totalorder %v410, %v538
        %vm544 = vcmp.eq.s32.totalorder %v410, %v542
        %vm545 = vcmp.eq.s32.totalorder %v411, %v538
        %vm546 = vcmp.eq.s32.totalorder %v411, %v542
        %vm547 = vcmp.eq.s32.totalorder %v412, %v538
        %vm548 = vcmp.eq.s32.totalorder %v412, %v542
        %vm549 = vcmp.eq.s32.totalorder %v413, %v538
        %vm550 = vcmp.eq.s32.totalorder %v413, %v542
        %vm551 = vcmp.eq.s32.totalorder %v414, %v538
        %vm552 = vcmp.eq.s32.totalorder %v414, %v542
        %vm553 = vcmp.eq.s32.totalorder %v415, %v538
        %vm554 = vcmp.eq.s32.totalorder %v415, %v542
        %vm555 = vcmp.eq.s32.totalorder %v416, %v538
        %vm556 = vcmp.eq.s32.totalorder %v416, %v542
        %vm557 = vcmp.eq.s32.totalorder %v417, %v538
        %vm558 = vcmp.eq.s32.totalorder %v417, %v542
        %vm559 = vcmp.eq.s32.totalorder %v418, %v538
        %vm560 = vcmp.eq.s32.totalorder %v418, %v542
        %vm561 = vcmp.eq.s32.totalorder %v419, %v538
        %vm562 = vcmp.eq.s32.totalorder %v419, %v542
        %vm563 = vcmp.eq.s32.totalorder %v420, %v538
        %vm564 = vcmp.eq.s32.totalorder %v420, %v542
        %vm565 = vcmp.eq.s32.totalorder %v421, %v538
        %vm566 = vcmp.eq.s32.totalorder %v421, %v542
        %vm567 = vcmp.eq.s32.totalorder %v422, %v538
        %vm568 = vcmp.eq.s32.totalorder %v422, %v542
        %vm569 = vcmp.eq.s32.totalorder %v523, %v538
        %vm570 = vcmp.eq.s32.totalorder %v523, %v542
        %vm571 = vcmp.eq.s32.totalorder %v524, %v538
        %vm572 = vcmp.eq.s32.totalorder %v524, %v542
        %vm573 = vcmp.eq.s32.totalorder %v525, %v538
        %vm574 = vcmp.eq.s32.totalorder %v525, %v542
        %vm575 = vcmp.eq.s32.totalorder %v526, %v538
        %vm576 = vcmp.eq.s32.totalorder %v526, %v542
        %vm577 = vcmp.eq.s32.totalorder %v527, %v538
        %vm578 = vcmp.eq.s32.totalorder %v527, %v542
        %vm579 = vcmp.eq.s32.totalorder %v528, %v538
        %vm580 = vcmp.eq.s32.totalorder %v528, %v542
        %vm581 = vcmp.eq.s32.totalorder %v529, %v538
        %vm582 = vcmp.eq.s32.totalorder %v529, %v542
        %vm583 = vcmp.eq.s32.totalorder %v530, %v538
        %vm584 = vcmp.eq.s32.totalorder %v530, %v542
        %vm585 = vcmp.eq.s32.totalorder %v531, %v538
        %vm586 = vcmp.eq.s32.totalorder %v531, %v542
        %vm587 = vcmp.eq.s32.totalorder %v532, %v538
        %vm588 = vcmp.eq.s32.totalorder %v532, %v542
        %vm589 = vcmp.eq.s32.totalorder %v533, %v538
        %vm590 = vcmp.eq.s32.totalorder %v533, %v542
        %vm591 = vcmp.eq.s32.totalorder %v534, %v538
        %vm592 = vcmp.eq.s32.totalorder %v534, %v542
        %v593 = vsel %vm543, 1, 0
        %v594 = vsel %vm544, 1, 0
        %v595 = vsel %vm545, 1, 0
        %v596 = vsel %vm546, 1, 0
        %v597 = vsel %vm547, 1, 0
        %v598 = vsel %vm548, 1, 0
        %v599 = vsel %vm549, 1, 0
        %v600 = vsel %vm550, 1, 0
        %v601 = vsel %vm551, 1, 0
        %v602 = vsel %vm552, 1, 0
        %v603 = vsel %vm553, 1, 0
        %v604 = vsel %vm554, 1, 0
        %v605 = vsel %vm555, 1, 0
        %v606 = vsel %vm556, 1, 0
        %v607 = vsel %vm557, 1, 0
        %v608 = vsel %vm558, 1, 0
        %v609 = vsel %vm559, 1, 0
        %v610 = vsel %vm560, 1, 0
        %v611 = vsel %vm561, 1, 0
        %v612 = vsel %vm562, 1, 0
        %v613 = vsel %vm563, 1, 0
        %v614 = vsel %vm564, 1, 0
        %v615 = vsel %vm565, 1, 0
        %v616 = vsel %vm566, 1, 0
        %v617 = vsel %vm567, 1, 0
        %v618 = vsel %vm568, 1, 0
        %v619 = vsel %vm569, 1, 0
        %v620 = vsel %vm570, 1, 0
        %v621 = vsel %vm571, 1, 0
        %v622 = vsel %vm572, 1, 0
        %v623 = vsel %vm573, 1, 0
        %v624 = vsel %vm574, 1, 0
        %v625 = vsel %vm575, 1, 0
        %v626 = vsel %vm576, 1, 0
        %v627 = vsel %vm577, 1, 0
        %v628 = vsel %vm578, 1, 0
        %v629 = vsel %vm579, 1, 0
        %v630 = vsel %vm580, 1, 0
        %v631 = vsel %vm581, 1, 0
        %v632 = vsel %vm582, 1, 0
        %v633 = vsel %vm583, 1, 0
        %v634 = vsel %vm584, 1, 0
        %v635 = vsel %vm585, 1, 0
        %v636 = vsel %vm586, 1, 0
        %v637 = vsel %vm587, 1, 0
        %v638 = vsel %vm588, 1, 0
        %v639 = vsel %vm589, 1, 0
        %v640 = vsel %vm590, 1, 0
        %v641 = vsel %vm591, 1, 0
        %v642 = vsel %vm592, 1, 0
        %v643 = vcvt.s32.f32 %v593
        %v644 = vcvt.s32.f32 %v594
        %v645 = vcvt.s32.f32 %v595
        %v646 = vcvt.s32.f32 %v596
        %v647 = vcvt.s32.f32 %v597
        %v648 = vcvt.s32.f32 %v598
        %v649 = vcvt.s32.f32 %v599
        %v650 = vcvt.s32.f32 %v600
        %v651 = vcvt.s32.f32 %v601
        %v652 = vcvt.s32.f32 %v602
        %v653 = vcvt.s32.f32 %v603
        %v654 = vcvt.s32.f32 %v604
        %v655 = vcvt.s32.f32 %v605
        %v656 = vcvt.s32.f32 %v606
        %v657 = vcvt.s32.f32 %v607
        %v658 = vcvt.s32.f32 %v608
        %v659 = vcvt.s32.f32 %v609
        %v660 = vcvt.s32.f32 %v610
        %v661 = vcvt.s32.f32 %v611
        %v662 = vcvt.s32.f32 %v612
        %v663 = vcvt.s32.f32 %v613
        %v664 = vcvt.s32.f32 %v614
        %v665 = vcvt.s32.f32 %v615
        %v666 = vcvt.s32.f32 %v616
        %v667 = vcvt.s32.f32 %v617
        %v668 = vcvt.s32.f32 %v618
        %v669 = vcvt.s32.f32 %v619
        %v670 = vcvt.s32.f32 %v620
        %v671 = vcvt.s32.f32 %v621
        %v672 = vcvt.s32.f32 %v622
        %v673 = vcvt.s32.f32 %v623
        %v674 = vcvt.s32.f32 %v624
        %v675 = vcvt.s32.f32 %v625
        %v676 = vcvt.s32.f32 %v626
        %v677 = vcvt.s32.f32 %v627
        %v678 = vcvt.s32.f32 %v628
        %v679 = vcvt.s32.f32 %v629
        %v680 = vcvt.s32.f32 %v630
        %v681 = vcvt.s32.f32 %v631
        %v682 = vcvt.s32.f32 %v632
        %v683 = vcvt.s32.f32 %v633
        %v684 = vcvt.s32.f32 %v634
        %v685 = vcvt.s32.f32 %v635
        %v686 = vcvt.s32.f32 %v636
        %v687 = vcvt.s32.f32 %v637
        %v688 = vcvt.s32.f32 %v638
        %v689 = vcvt.s32.f32 %v639
        %v690 = vcvt.s32.f32 %v640
        %v691 = vcvt.s32.f32 %v641
        %v692 = vcvt.s32.f32 %v642
        %v693 = vpack.c.bf16 %v645, %v643
        %v694 = vpack.c.bf16 %v646, %v644
        %v695 = vpack.c.bf16 %v649, %v647
        %v696 = vpack.c.bf16 %v650, %v648
        %v697 = vpack.c.bf16 %v653, %v651
        %v698 = vpack.c.bf16 %v654, %v652
        %v699 = vpack.c.bf16 %v657, %v655
        %v700 = vpack.c.bf16 %v658, %v656
        %v701 = vpack.c.bf16 %v661, %v659
        %v702 = vpack.c.bf16 %v662, %v660
        %v703 = vpack.c.bf16 %v665, %v663
        %v704 = vpack.c.bf16 %v666, %v664
        %v705 = vpack.c.bf16 %v669, %v667
        %v706 = vpack.c.bf16 %v670, %v668
        %v707 = vpack.c.bf16 %v673, %v671
        %v708 = vpack.c.bf16 %v674, %v672
        %v709 = vpack.c.bf16 %v677, %v675
        %v710 = vpack.c.bf16 %v678, %v676
        %v711 = vpack.c.bf16 %v681, %v679
        %v712 = vpack.c.bf16 %v682, %v680
        %v713 = vpack.c.bf16 %v685, %v683
        %v714 = vpack.c.bf16 %v686, %v684
        %v715 = vpack.c.bf16 %v689, %v687
        %v716 = vpack.c.bf16 %v690, %v688
        %v717 = vpack.c.bf16 %v691, %v691
        %v718 = vpack.c.bf16 %v692, %v692
        %v719 = vld [vmem:[%s4] sm:$0xff]
        %v720 = vld [vmem:[%s4 + $0x8] sm:$0xff]
        %v721 = vld [vmem:[%s4 + $0x10] sm:$0xff]
        %v722 = vld [vmem:[%s4 + $0x18] sm:$0xff]
        %v723 = vld [vmem:[%s2] sm:$0xf]
        %v724 = vld [vmem:[%s2 + $0x4] sm:$0xf]
        %v725 = vld [vmem:[%s2 + $0x8] sm:$0xf]
        %v726 = vld [vmem:[%s2 + $0xc] sm:$0xf]
        %v727 = vld [vmem:[%s3] sm:$0xff]
        %v728 = vld [vmem:[%s3 + $0x8] sm:$0xff]
        %v729 = vld [vmem:[%s3 + $0x10] sm:$0xff]
        %v730 = vld [vmem:[%s3 + $0x18] sm:$0xff]
        %v735 = vunpack.c.l.b16 %v727
        %v736 = vunpack.c.h.b16 %v727
        %v737 = vunpack.c.l.b16 %v728
        %v738 = vunpack.c.h.b16 %v728
        %v739 = vunpack.c.l.b16 %v729
        %v740 = vunpack.c.h.b16 %v729
        %v741 = vunpack.c.l.b16 %v730
        %v742 = vunpack.c.h.b16 %v730
        %v743 = vpack.c.b16 %v737, %v735
        %v744 = vpack.c.b16 %v738, %v736
        %v745 = vpack.c.b16 %v741, %v739
        %v746 = vpack.c.b16 %v742, %v740
        %vm749 = vcmask 588800
        %v751 = vsel %vm749, %v744, 0
        %v754 = vsel %vm749, %v746, 0
        %vm756 = vcmask 1043456
        %v758 = vsel %vm756, %v717, 0
        %v761 = vsel %vm756, %v718, 0
        %763 = vmatprep.subr.bf16.mxu0 %v708
        %764 = vmatpush1.bf16.msra.mxu0 %v707
        %765 = vmatprep.subr.bf16.mxu0 %v706
        %766 = vmatpush1.bf16.msra.mxu0 %v705
        %767 = vmatprep.subr.bf16.mxu0 %v704
        %768 = vmatpush1.bf16.msra.mxu0 %v703
        %769 = vmatprep.subr.bf16.mxu0 %v702
        %770 = vmatpush1.bf16.msra.mxu0 %v701
        %771 = vmatprep.subr.bf16.mxu0 %v700
        %772 = vmatpush1.bf16.msra.mxu0 %v699
        %773 = vmatprep.subr.bf16.mxu0 %v698
        %774 = vmatpush1.bf16.msra.mxu0 %v697
        %775 = vmatprep.subr.bf16.mxu0 %v696
        %776 = vmatpush1.bf16.msra.mxu0 %v695
        %777 = vmatprep.subr.bf16.mxu0 %v694
        %778 = vmatpush1.bf16.msra.mxu0 %v693
        %779 = vmatprep.subr.bf16.mxu0 0
        %780 = vmatpush2.bf16.msra.mxu0 0
        %781 = vmatprep.subr.bf16.mxu0 0
        %782 = vmatpush2.bf16.msra.mxu0 0
        %783 = vmatprep.subr.bf16.mxu0 0
        %784 = vmatpush2.bf16.msra.mxu0 0
        %785 = vmatprep.subr.bf16.mxu0 %v761
        %786 = vmatpush2.bf16.msra.mxu0 %v758
        %787 = vmatprep.subr.bf16.mxu0 %v716
        %788 = vmatpush2.bf16.msra.mxu0 %v715
        %789 = vmatprep.subr.bf16.mxu0 %v714
        %790 = vmatpush2.bf16.msra.mxu0 %v713
        %791 = vmatprep.subr.bf16.mxu0 %v712
        %792 = vmatpush2.bf16.msra.mxu0 %v711
        %793 = vmatprep.subr.bf16.mxu0 %v710
        %794 = vmatpush2.bf16.msra.mxu0 %v709
        %795 = vmatprep.mubr.bf16.mxu0 %v751
        %796 = vmatmul.mubr.bf16.gmra.mxu0 %v743
        %v797 = vpop.f32.mrf.mxu0
        %v798 = vadd.f32 0.0, %v797
        %v799 = vpop.f32.mrf.mxu0
        %v800 = vadd.f32 0.0, %v799
        %v801 = vpop.f32.mrf.mxu0
        %v802 = vadd.f32 0.0, %v801
        %v803 = vpop.f32.mrf.mxu0
        %v804 = vadd.f32 0.0, %v803
        %805 = vmatprep.mubr.bf16.mxu0 %v754
        %806 = vmatmul.mubr.bf16.gmra.mxu0 %v745
        %v807 = vpop.f32.mrf.mxu0
        %v808 = vadd.f32 0.0, %v807
        %v809 = vpop.f32.mrf.mxu0
        %v810 = vadd.f32 0.0, %v809
        %v811 = vpop.f32.mrf.mxu0
        %v812 = vadd.f32 0.0, %v811
        %v813 = vpop.f32.mrf.mxu0
        %v814 = vadd.f32 0.0, %v813
        %815 = vdwg.mxu0
        %v820 = vunpack.c.l.b16 %v723
        %v821 = vunpack.c.l.b16 %v724
        %v822 = vunpack.c.l.b16 %v725
        %v823 = vunpack.c.l.b16 %v726
        %v824 = vpack.c.b16 %v821, %v820
        %v825 = vpack.c.b16 %v823, %v822
        %vm826 = vcmask 818176
        %v828 = vsel %vm826, %v824, 0
        %v831 = vsel %vm826, %v825, 0
        %vm833 = vcmask 1041408
        %v835 = vsel %vm833, %v521, 0
        %v838 = vsel %vm833, %v522, 0
        %840 = vmatprep.subr.bf16.mxu0 0
        %841 = vmatpush1.bf16.msra.mxu0 0
        %842 = vmatprep.subr.bf16.mxu0 %v838
        %843 = vmatpush1.bf16.msra.mxu0 %v835
        %844 = vmatprep.subr.bf16.mxu0 %v520
        %845 = vmatpush1.bf16.msra.mxu0 %v519
        %846 = vmatprep.subr.bf16.mxu0 %v518
        %847 = vmatpush1.bf16.msra.mxu0 %v517
        %848 = vmatprep.subr.bf16.mxu0 %v516
        %849 = vmatpush1.bf16.msra.mxu0 %v515
        %850 = vmatprep.subr.bf16.mxu0 %v514
        %851 = vmatpush1.bf16.msra.mxu0 %v513
        %852 = vmatprep.subr.bf16.mxu0 %v512
        %853 = vmatpush1.bf16.msra.mxu0 %v511
        %854 = vmatprep.subr.bf16.mxu0 %v510
        %855 = vmatpush1.bf16.msra.mxu0 %v509
        %856 = vmatprep.subr.bf16.mxu0 0
        %857 = vmatpush2.bf16.msra.mxu0 0
        %858 = vmatprep.subr.bf16.mxu0 0
        %859 = vmatpush2.bf16.msra.mxu0 0
        %860 = vmatprep.subr.bf16.mxu0 0
        %861 = vmatpush2.bf16.msra.mxu0 0
        %862 = vmatprep.subr.bf16.mxu0 0
        %863 = vmatpush2.bf16.msra.mxu0 0
        %864 = vmatprep.subr.bf16.mxu0 0
        %865 = vmatpush2.bf16.msra.mxu0 0
        %866 = vmatprep.subr.bf16.mxu0 0
        %867 = vmatpush2.bf16.msra.mxu0 0
        %868 = vmatprep.subr.bf16.mxu0 0
        %869 = vmatpush2.bf16.msra.mxu0 0
        %870 = vmatprep.subr.bf16.mxu0 0
        %871 = vmatpush2.bf16.msra.mxu0 0
        %872 = vmatprep.mubr.bf16.mxu0 0
        %873 = vmatmul.mubr.bf16.gmra.mxu0 %v828
        %v874 = vpop.f32.mrf.mxu0
        %v875 = vadd.f32 %v798, %v874
        %v876 = vpop.f32.mrf.mxu0
        %v877 = vadd.f32 %v800, %v876
        %v878 = vpop.f32.mrf.mxu0
        %v879 = vadd.f32 %v802, %v878
        %v880 = vpop.f32.mrf.mxu0
        %v881 = vadd.f32 %v804, %v880
        %882 = vmatprep.mubr.bf16.mxu0 0
        %883 = vmatmul.mubr.bf16.gmra.mxu0 %v831
        %v884 = vpop.f32.mrf.mxu0
        %v885 = vadd.f32 %v808, %v884
        %v886 = vpop.f32.mrf.mxu0
        %v887 = vadd.f32 %v810, %v886
        %v888 = vpop.f32.mrf.mxu0
        %v889 = vadd.f32 %v812, %v888
        %v890 = vpop.f32.mrf.mxu0
        %v891 = vadd.f32 %v814, %v890
        %892 = vdwg.mxu0
        %894 = vset.pattern.permute.xlu0 0
        %895 = vperm.xlu0 %894, %v719
        %v896 = vpop.permute.xlu0 %895
        %899 = vset.pattern.permute.xlu0 0
        %900 = vperm.xlu0 %899, %v720
        %v901 = vpop.permute.xlu0 %900
        %904 = vset.pattern.permute.xlu0 0
        %905 = vperm.xlu0 %904, %v721
        %v906 = vpop.permute.xlu0 %905
        %909 = vset.pattern.permute.xlu0 0
        %910 = vperm.xlu0 %909, %v722
        %v911 = vpop.permute.xlu0 %910
        %v913 = vadd.f32 %v875, %v896
        %v914 = vadd.f32 %v877, %v896
        %v915 = vadd.f32 %v879, %v901
        %v916 = vadd.f32 %v881, %v901
        %v917 = vadd.f32 %v885, %v906
        %v918 = vadd.f32 %v887, %v906
        %v919 = vadd.f32 %v889, %v911
        %v920 = vadd.f32 %v891, %v911
        %v921 = vmax.f32 %v913, 0.0
        %v922 = vmax.f32 %v914, 0.0
        %v923 = vmax.f32 %v915, 0.0
        %v924 = vmax.f32 %v916, 0.0
        %v925 = vmax.f32 %v917, 0.0
        %v926 = vmax.f32 %v918, 0.0
        %v927 = vmax.f32 %v919, 0.0
        %v928 = vmax.f32 %v920, 0.0
        %v929 = vld [vmem:[%s5] sm:$0xf]
        %v930 = vld [vmem:[%s5 + $0x4] sm:$0xf]
        %v931 = vld [vmem:[%s6] sm:$0xff]
        %v932 = vld [vmem:[%s6 + $0x8] sm:$0xff]
        %v933 = vpack.c.bf16 %v923, %v921
        %v934 = vpack.c.bf16 %v924, %v922
        %v935 = vpack.c.bf16 %v927, %v925
        %v936 = vpack.c.bf16 %v928, %v926
        %938 = vset.pattern.permute.xlu0 0
        %939 = vperm.xlu0 %938, %v931
        %v940 = vpop.permute.xlu0 %939
        %943 = vset.pattern.permute.xlu0 0
        %944 = vperm.xlu0 %943, %v932
        %v945 = vpop.permute.xlu0 %944
        %v949 = vunpack.c.l.b16 %v929
        %v950 = vunpack.c.l.b16 %v930
        %v951 = vpack.c.b16 %v950, %v949
        %vm952 = vcmask 261120
        %v954 = vsel %vm952, %v951, 0
        %956 = vmatprep.subr.bf16.mxu0 0
        %957 = vmatpush1.bf16.msra.mxu0 0
        %958 = vmatprep.subr.bf16.mxu0 0
        %959 = vmatpush1.bf16.msra.mxu0 0
        %960 = vmatprep.subr.bf16.mxu0 0
        %961 = vmatpush1.bf16.msra.mxu0 0
        %962 = vmatprep.subr.bf16.mxu0 0
        %963 = vmatpush1.bf16.msra.mxu0 0
        %964 = vmatprep.subr.bf16.mxu0 0
        %965 = vmatpush1.bf16.msra.mxu0 0
        %966 = vmatprep.subr.bf16.mxu0 0
        %967 = vmatpush1.bf16.msra.mxu0 0
        %968 = vmatprep.subr.bf16.mxu0 %v936
        %969 = vmatpush1.bf16.msra.mxu0 %v935
        %970 = vmatprep.subr.bf16.mxu0 %v934
        %971 = vmatpush1.bf16.msra.mxu0 %v933
        %972 = vmatprep.subr.bf16.mxu0 0
        %973 = vmatpush2.bf16.msra.mxu0 0
        %974 = vmatprep.subr.bf16.mxu0 0
        %975 = vmatpush2.bf16.msra.mxu0 0
        %976 = vmatprep.subr.bf16.mxu0 0
        %977 = vmatpush2.bf16.msra.mxu0 0
        %978 = vmatprep.subr.bf16.mxu0 0
        %979 = vmatpush2.bf16.msra.mxu0 0
        %980 = vmatprep.subr.bf16.mxu0 0
        %981 = vmatpush2.bf16.msra.mxu0 0
        %982 = vmatprep.subr.bf16.mxu0 0
        %983 = vmatpush2.bf16.msra.mxu0 0
        %984 = vmatprep.subr.bf16.mxu0 0
        %985 = vmatpush2.bf16.msra.mxu0 0
        %986 = vmatprep.subr.bf16.mxu0 0
        %987 = vmatpush2.bf16.msra.mxu0 0
        %988 = vmatprep.mubr.bf16.mxu0 0
        %989 = vmatmul.mubr.bf16.gmra.mxu0 %v954
        %v990 = vpop.f32.mrf.mxu0
        %v991 = vadd.f32 %v940, %v990
        %v992 = vpop.f32.mrf.mxu0
        %v993 = vadd.f32 %v940, %v992
        %v994 = vpop.f32.mrf.mxu0
        %v995 = vadd.f32 %v945, %v994
        %v996 = vpop.f32.mrf.mxu0
        %v997 = vadd.f32 %v945, %v996
        %998 = vdwg.mxu0
        %v999 = vmax.f32 %v991, 0.0
        %v1000 = vmax.f32 %v993, 0.0
        %v1001 = vmax.f32 %v995, 0.0
        %v1002 = vmax.f32 %v997, 0.0
        %v1003 = vld [vmem:[%s7] sm:$0xf]
        %v1004 = vld [vmem:[%s8] sm:$0xff]
        %v1005 = vpack.c.bf16 %v1001, %v999
        %v1006 = vpack.c.bf16 %v1002, %v1000
        %1008 = vset.pattern.permute.xlu0 0
        %1009 = vperm.xlu0 %1008, %v1004
        %v1010 = vpop.permute.xlu0 %1009
        %vm1012 = vcmask 130048
        %v1014 = vsel %vm1012, %v1003, 0
        %1016 = vmatprep.subr.bf16.mxu0 0
        %1017 = vmatpush1.bf16.msra.mxu0 0
        %1018 = vmatprep.subr.bf16.mxu0 0
        %1019 = vmatpush1.bf16.msra.mxu0 0
        %1020 = vmatprep.subr.bf16.mxu0 0
        %1021 = vmatpush1.bf16.msra.mxu0 0
        %1022 = vmatprep.subr.bf16.mxu0 0
        %1023 = vmatpush1.bf16.msra.mxu0 0
        %1024 = vmatprep.subr.bf16.mxu0 0
        %1025 = vmatpush1.bf16.msra.mxu0 0
        %1026 = vmatprep.subr.bf16.mxu0 0
        %1027 = vmatpush1.bf16.msra.mxu0 0
        %1028 = vmatprep.subr.bf16.mxu0 0
        %1029 = vmatpush1.bf16.msra.mxu0 0
        %1030 = vmatprep.subr.bf16.mxu0 %v1006
        %1031 = vmatpush1.bf16.msra.mxu0 %v1005
        %1032 = vmatprep.subr.bf16.mxu0 0
        %1033 = vmatpush2.bf16.msra.mxu0 0
        %1034 = vmatprep.subr.bf16.mxu0 0
        %1035 = vmatpush2.bf16.msra.mxu0 0
        %1036 = vmatprep.subr.bf16.mxu0 0
        %1037 = vmatpush2.bf16.msra.mxu0 0
        %1038 = vmatprep.subr.bf16.mxu0 0
        %1039 = vmatpush2.bf16.msra.mxu0 0
        %1040 = vmatprep.subr.bf16.mxu0 0
        %1041 = vmatpush2.bf16.msra.mxu0 0
        %1042 = vmatprep.subr.bf16.mxu0 0
        %1043 = vmatpush2.bf16.msra.mxu0 0
        %1044 = vmatprep.subr.bf16.mxu0 0
        %1045 = vmatpush2.bf16.msra.mxu0 0
        %1046 = vmatprep.subr.bf16.mxu0 0
        %1047 = vmatpush2.bf16.msra.mxu0 0
        %1048 = vmatprep.mubr.bf16.mxu0 0
        %1049 = vmatmul.mubr.bf16.gmra.mxu0 %v1014
        %v1050 = vpop.f32.mrf.mxu0
        %v1051 = vadd.f32 %v1010, %v1050
        %v1052 = vpop.f32.mrf.mxu0
        %v1053 = vadd.f32 %v1010, %v1052
        %v1054 = vpop.f32.mrf.mxu0
        %v1055 = vpop.f32.mrf.mxu0
        %1056 = vdwg.mxu0
        %v1057 = vmax.f32 %v1051, 0.0
        %v1058 = vmax.f32 %v1053, 0.0
        %v1059 = vld [vmem:[%s9] sm:$0xff]
        %v1060 = vld [vmem:[#allocation2] sm:$0x1]
        %1062 = vset.pattern.permute.xlu0 0
        %1063 = vperm.xlu0 %1062, %v1059
        %v1064 = vpop.permute.xlu0 %1063
        %v1066 = vmul.f32 %v1064, %v1057
        %v1067 = vmul.f32 %v1064, %v1058
        %v1068 = vrot.slane %v1066, 4
        %v1069 = vadd.f32 %v1066, %v1068
        %v1070 = vrot.slane %v1069, 2
        %v1071 = vadd.f32 %v1069, %v1070
        %v1072 = vrot.slane %v1071, 1
        %v1073 = vadd.f32 %v1071, %v1072
        %v1074 = vrot.slane %v1067, 4
        %v1075 = vadd.f32 %v1067, %v1074
        %v1076 = vrot.slane %v1075, 2
        %v1077 = vadd.f32 %v1075, %v1076
        %v1078 = vrot.slane %v1077, 1
        %v1079 = vadd.f32 %v1077, %v1078
        %1081 = vset.pattern.permute.xlu0 0
        %1082 = vperm.xlu0 %1081, %v1060
        %v1083 = vpop.permute.xlu0 %1082
        %v1085 = vlaneseq
        %v1086 = vshrl.u32 %v1085, 7
        %v1087 = vsub.s32 0, %v1086
        %v1088 = vrot.slane %v1083, %v1087
        %v1089 = vadd.f32 %v1073, %v1088
        %v1090 = vadd.f32 %v1079, %v1088
        %v1091 = vxor.u32 %v1089, 2147483648
        %v1092 = vxor.u32 %v1090, 2147483648
        %v1093 = vmul.f32 %v1091, 1.442695
        %v1094 = vpow.pop %v1093
        %v1095 = vmul.f32 %v1092, 1.442695
        %v1096 = vpow.pop %v1095
        %v1097 = vadd.f32 %v1094, 1.0
        %v1098 = vadd.f32 %v1096, 1.0
        %v1099 = vrcp.pop %v1097
        %v1100 = vmul.f32 1.0, %v1099
        %v1101 = vrcp.pop %v1098
        %v1102 = vmul.f32 1.0, %v1101
        %v1105 = vcombine.low %v1100, %v1102
        %v1107 = vunpack.c.l.s4 1966171168
        %v1108 = vunpack.c.0.s8 %v1107
        %v1109 = vlaneseq
        %v1110 = vshrl.u32 %v1109, 7
        %v1111 = vsub.s32 %v1108, %v1110
        %v1112 = vrot.slane %v1105, %v1111
        %v1114 = vunpack.c.l.s4 1966171168
        %v1115 = vunpack.c.0.s8 %v1114
        %v1116 = vlaneseq
        %v1117 = vshrl.u32 %v1116, 7
        %v1118 = vsub.s32 %v1115, %v1117
        %v1119 = vrot.slane %v1112, %v1118
        %v1121 = vlaneseq
        %vm1122 = vcmp.ge.s32.totalorder %v1121, 0
        %vm1123 = vcmp.lt.s32.totalorder %v1121, 256
        %vm1124 = vmand %vm1122, %vm1123
        %1125 = vst.msk [vmem:[%s394] sm:$0x3] %vm1124, %v1119
        %s1126 = sand.u32 %s276, 1
        %s1127 = scalar_lea.sflag [#allocation4], %s1126
        %s1128 = sand.u32 %s276, 1
        %s1129 = smul.addr %s1128, 2
        %s1130 = scalar_lea.vmem [#allocation3], %s1129
        // Predicated region
        $region65: #{tpu_custom_call.1} parent=63 // pred_check
          %p1131 = pneg %p286
        $region66: #{tpu_custom_call.1} parent=63 // pred_check_branch
          %1133 = sbr.rel (%p1131) target = $region68
        $region67: #{tpu_custom_call.1} parent=63 // pred_region
          %s1134 = smul.u32 2, %s27
          %s1136 = ssub.s32 32, 32
          %1137 = vsyncadd %s1127, %s1136
          %s1138 = smul.addr %s1134, 16
          %s1139 = scalar_lea.hbm %s11, %s1138
          %s1141 = sshll.u32 %s1130, 4
          %s1142 = int_to_ptr.vmem [resolvable:$true] %s1141
          %1144 = dma.vmem_to_hbm [thread:$0]  %s1142, 32, %s1139, %s1127
        $region68: #{tpu_custom_call.1} parent=63 // pred_fallthru
          _
      $region64: #{tpu_custom_call.1} parent=5 // pred_fallthru
        _
      %p1145 = scmp.le.s32.totalorder 2, %s22
      // Predicated region
      $region69: #{tpu_custom_call.1} parent=5 // pred_check
        %p1146 = pneg %p1145
      $region70: #{tpu_custom_call.1} parent=5 // pred_check_branch
        %1148 = sbr.rel (%p1146) target = $region72
      $region71: #{tpu_custom_call.1} parent=5 // pred_region
        %s1149 = ssub.s32 %s22, 2
        // Predicated region
        $region73: #{tpu_custom_call.1} parent=71 // pred_check
          %p1150 = pneg %p292
        $region74: #{tpu_custom_call.1} parent=71 // pred_check_branch
          %1152 = sbr.rel (%p1150) target = $region76
        $region75: #{tpu_custom_call.1} parent=71 // pred_region
          %s1153 = sand.u32 %s277, 1
          %s1154 = scalar_lea.sflag [#allocation4], %s1153
          %s1155 = sand.u32 %s277, 1
          %s1156 = smul.addr %s1155, 2
          %s1157 = scalar_lea.vmem [#allocation3], %s1156
          %1158 = dma.done %s1154, 32
        $region76: #{tpu_custom_call.1} parent=71 // pred_fallthru
          _
      $region72: #{tpu_custom_call.1} parent=5 // pred_fallthru
        _
    $region6: #{tpu_custom_call.1} parent=1 // loop_footer
      %s26 = sadd.s32 1, %s22
    $region7: #{tpu_custom_call.1} parent=1 // loop_footer_branch
      %21 = sbr.rel target = $region3
    $region8: #{tpu_custom_call.1} parent=1 // loop_exit
      _
    %1159 = vsyncpa [#allocation4], 1
    %s1160 = scalar_lea.sflag [#allocation4], 1
    %1161 = vsyncpa %s1160, 1

</llo_original>
